<compile_context>
chip_gen: v7x
topology: tpu7x:2x2x1
jax: 0.10.0
libtpu: 0.0.40
codegen_flags: <defaults>
</compile_context>

<pallas_src>
import functools

import jax
import jax.numpy as jnp
from jax.experimental import pallas as pl
from jax.experimental.pallas import tpu as pltpu

# ----------------------------- configuration --------------------------------
MODEL_DIM = 32     # model_dim
HIDDEN_DIM = 100   # hidden_dim (small stand-in for the default 1000; NOT a lane
                   # multiple on purpose -> exercises the zero-pad-to-128 path)
CLIP_DIM = 16      # clip_dim
BATCH = 160        # rows of x; not a multiple of TILE_N -> exercises row masking
TILE_N = 64        # rows per grid step (multiple of 16 for bf16 sublane packing)
LANE = 128


def _round_up(v, m):
    return (v + m - 1) // m * m


HID_PAD = _round_up(HIDDEN_DIM, LANE)    # 128
CLIP_PAD = _round_up(CLIP_DIM, LANE)     # 128 (lane-dense output slab)


# ------------------------------ GELU (exact erf) ------------------------------
_SQRT_HALF = 0.7071067811865476


def _erf(z):
    # Abramowitz & Stegun 7.1.26 (|err| <= 1.5e-7, f32-exact).  Reciprocal via
    # EUP approx seed + one Newton step: the seed issues on the otherwise-idle
    # EUP slot and the refinement is 2 cheap VPU ops.
    p = 0.3275911
    a1, a2, a3, a4, a5 = (0.254829592, -0.284496736, 1.421413741,
                          -1.453152027, 1.061405429)
    s = jnp.where(z >= 0.0, 1.0, -1.0)
    az = jnp.abs(z)
    d = 1.0 + p * az
    t = pl.reciprocal(d, approx=True)
    t = t * (2.0 - d * t)                      # Newton refinement -> ~f32 exact
    poly = ((((a5 * t + a4) * t + a3) * t + a2) * t + a1) * t
    return s * (1.0 - poly * jnp.exp(-az * az))


def _gelu_exact(x):
    # torch.nn.GELU() default (approximate='none'): 0.5 * x * (1 + erf(x/sqrt(2)))
    return 0.5 * x * (1.0 + _erf(x * _SQRT_HALF))


# ------------------------------ Pallas kernels --------------------------------
def _hidden_tile(x_ref, w1_ref, b1_ref):
    # [TILE_N, Dm](bf16) @ [Dm, HID_PAD](bf16) -> f32 accumulate, +b1, GELU in f32.
    h = jnp.dot(x_ref[...], w1_ref[...], preferred_element_type=jnp.float32)
    return _gelu_exact(h + b1_ref[...])


def _aligner_reduce_kernel(x_ref, w1_ref, b1_ref, w2_ref, b2_ref, o_ref, acc_ref,
                           *, tile_n, n_rows):
    i = pl.program_id(0)

    @pl.when(i == 0)
    def _():
        acc_ref[...] = jnp.zeros_like(acc_ref)

    h = _hidden_tile(x_ref, w1_ref, b1_ref)                    # [tile_n, HID_PAD] f32
    # Mask rows past n_rows (ragged last tile): gelu(b1) != 0 and the padded
    # block region holds unspecified data, so masking is required for the sum.
    row = i * tile_n + jax.lax.broadcasted_iota(jnp.int32, h.shape, 0)
    h = jnp.where(row < n_rows, h, 0.0)
    # Fold the batch sum BEFORE the second matmul (exact): sum_N(h) @ w2 + N*b2.
    acc_ref[...] += jnp.sum(h, axis=0, keepdims=True)          # [1, HID_PAD] f32

    @pl.when(i == pl.num_programs(0) - 1)
    def _():
        w2 = w2_ref[...].astype(jnp.float32)                   # tiny, finalize-only
        out = jnp.dot(acc_ref[...], w2, preferred_element_type=jnp.float32)
        o_ref[...] = out + n_rows * b2_ref[...]


def _aligner_rows_kernel(x_ref, w1_ref, b1_ref, w2_ref, b2_ref, o_ref):
    h = _hidden_tile(x_ref, w1_ref, b1_ref)                    # f32
    out = jnp.dot(h.astype(jnp.bfloat16), w2_ref[...],
                  preferred_element_type=jnp.float32)
    o_ref[...] = out + b2_ref[...]


# ------------------------------ wrapper --------------------------------------
def mlp_aligner_forward(params, x, *, clip_dim, reduce=True, tile_n=TILE_N):
    """x: [N, model_dim] float32.  Matches MLPAligner.forward: mlp(x) and, if
    reduce, sum over dim 0 -> [clip_dim]; else [N, clip_dim]."""
    n, model_dim = x.shape
    hid_pad = params["w1"].shape[1]
    clip_pad = params["w2"].shape[1]
    num_tiles = pl.cdiv(n, tile_n)

    x = x.astype(jnp.bfloat16)                  # bf16 into the MXU, f32 accumulate

    const = lambda i: (0, 0)                    # weights/biases stay VMEM-resident
    in_specs = [
        pl.BlockSpec((tile_n, model_dim), lambda i: (i, 0)),   # x: streamed row tiles
        pl.BlockSpec((model_dim, hid_pad), const),             # w1
        pl.BlockSpec((1, hid_pad), const),                     # b1
        pl.BlockSpec((hid_pad, clip_pad), const),              # w2
        pl.BlockSpec((1, clip_pad), const),                    # b2
    ]

    # Cost hint so XLA can overlap surrounding HLO with this latency-bound call.
    flops = 2 * n * model_dim * hid_pad + (2 * hid_pad * clip_pad if reduce
                                           else 2 * n * hid_pad * clip_pad)
    bytes_accessed = (n * model_dim * 2 + model_dim * hid_pad * 2
                      + hid_pad * clip_pad * 2 + (hid_pad + clip_pad) * 4
                      + (1 if reduce else n) * clip_pad * 4)
    cost = pl.CostEstimate(flops=flops, transcendentals=n * hid_pad,
                           bytes_accessed=bytes_accessed)

    # Per-step VMEM footprint is tiny (<1 MiB) at these tiles; 32 MiB keeps
    # headroom on every generation (v7x scoped default is 32 MiB of 64 physical).
    vmem_limit = 32 * 1024 * 1024

    if reduce:
        # TODO(synk): on v7x, split rows across the 2 TensorCores with per-core
        # partial sums combined at the end; the accumulator grid below is serial.
        kernel = functools.partial(_aligner_reduce_kernel, tile_n=tile_n, n_rows=n)
        out = pl.pallas_call(
            kernel,
            grid=(num_tiles,),
            in_specs=in_specs,
            out_specs=pl.BlockSpec((1, clip_pad), const),      # resident across grid
            out_shape=jax.ShapeDtypeStruct((1, clip_pad), jnp.float32),
            scratch_shapes=[pltpu.VMEM((1, hid_pad), jnp.float32)],
            compiler_params=pltpu.CompilerParams(
                dimension_semantics=("arbitrary",),            # reduction axis
                vmem_limit_bytes=vmem_limit),
            cost_estimate=cost,
        )(x, params["w1"], params["b1"], params["w2"], params["b2"])
        return out[0, :clip_dim]

    out = pl.pallas_call(
        _aligner_rows_kernel,
        grid=(num_tiles,),
        in_specs=in_specs,
        out_specs=pl.BlockSpec((tile_n, clip_pad), lambda i: (i, 0)),
        out_shape=jax.ShapeDtypeStruct((n, clip_pad), jnp.float32),
        compiler_params=pltpu.CompilerParams(
            dimension_semantics=("parallel",),                 # rows independent
            vmem_limit_bytes=vmem_limit),
        cost_estimate=cost,
    )(x, params["w1"], params["b1"], params["w2"], params["b2"])
    return out[:, :clip_dim]


# ------------------------------ parameters -----------------------------------
def init_params(key, model_dim=MODEL_DIM, hidden_dim=HIDDEN_DIM, clip_dim=CLIP_DIM):
    k1, k2, k3, k4 = jax.random.split(key, 4)
    hid_pad = _round_up(hidden_dim, LANE)
    clip_pad = _round_up(clip_dim, LANE)
    # nn.Linear stores weight as [out, in] and computes x @ W.T + b.  Transpose
    # ONCE here, zero-pad hidden/clip to lane multiples (exact: gelu(0)=0 and
    # padded w2 rows/cols are zero), and cast matmul operands to bf16 (f32
    # accumulation happens in-kernel).
    w1 = 0.05 * jax.random.normal(k1, (hidden_dim, model_dim), jnp.float32)
    b1 = 0.05 * jax.random.normal(k2, (hidden_dim,), jnp.float32)
    w2 = 0.05 * jax.random.normal(k3, (clip_dim, hidden_dim), jnp.float32)
    b2 = 0.05 * jax.random.normal(k4, (clip_dim,), jnp.float32)
    w1p = jnp.zeros((model_dim, hid_pad), jnp.float32).at[:, :hidden_dim].set(w1.T)
    b1p = jnp.zeros((1, hid_pad), jnp.float32).at[:, :hidden_dim].set(b1)
    w2p = jnp.zeros((hid_pad, clip_pad), jnp.float32).at[:hidden_dim, :clip_dim].set(w2.T)
    b2p = jnp.zeros((1, clip_pad), jnp.float32).at[:, :clip_dim].set(b2)
    return {"w1": w1p.astype(jnp.bfloat16), "b1": b1p,
            "w2": w2p.astype(jnp.bfloat16), "b2": b2p}


# ------------------------------ reference (pure JAX) --------------------------
def reference_forward(params, x, *, clip_dim, reduce=True):
    # Mirrors the kernel's mixed-precision recipe (bf16 matmul operands, f32
    # accumulate, f32 GELU, sum folded before the 2nd matmul when reduce=True),
    # with jax.nn.gelu(approximate=False) as the exact erf-GELU reference.
    xb = x.astype(jnp.bfloat16)
    h = jnp.dot(xb, params["w1"], preferred_element_type=jnp.float32) + params["b1"]
    h = jax.nn.gelu(h, approximate=False)
    if reduce:
        acc = jnp.sum(h, axis=0, keepdims=True)
        out = acc @ params["w2"].astype(jnp.float32) + x.shape[0] * params["b2"]
        return out[0, :clip_dim]
    out = jnp.dot(h.astype(jnp.bfloat16), params["w2"],
                  preferred_element_type=jnp.float32) + params["b2"]
    return out[:, :clip_dim]


# ---------------------------------- main --------------------------------------
if __name__ == "__main__":
    key = jax.random.PRNGKey(0)
    pkey, xkey = jax.random.split(key)
    params = init_params(pkey)
    x = jax.random.normal(xkey, (BATCH, MODEL_DIM), dtype=jnp.float32)

    fwd_reduce = jax.jit(functools.partial(mlp_aligner_forward,
                                           clip_dim=CLIP_DIM, reduce=True))
    fwd_rows = jax.jit(functools.partial(mlp_aligner_forward,
                                         clip_dim=CLIP_DIM, reduce=False))

    out_r = jax.block_until_ready(fwd_reduce(params, x))
    out_n = jax.block_until_ready(fwd_rows(params, x))

    assert out_r.shape == (CLIP_DIM,) and out_r.dtype == jnp.float32, (out_r.shape, out_r.dtype)
    assert out_n.shape == (BATCH, CLIP_DIM) and out_n.dtype == jnp.float32, (out_n.shape, out_n.dtype)

    ref_r = reference_forward(params, x, clip_dim=CLIP_DIM, reduce=True)
    ref_n = reference_forward(params, x, clip_dim=CLIP_DIM, reduce=False)
    assert bool(jnp.allclose(out_r, ref_r, atol=1e-3, rtol=1e-3)), (out_r, ref_r)
    assert bool(jnp.allclose(out_n, ref_n, atol=1e-3, rtol=1e-3)), (out_n, ref_n)
    print("KERNEL_OK")
</pallas_src>

<mosaic_0001>
module attributes {stable_mosaic.version = 11 : i64} {
  func.func @_aligner_reduce_kernel(%arg0: i32, %arg1: memref<64x32xbf16, #tpu.memory_space<vmem>>, %arg2: memref<32x128xbf16, #tpu.memory_space<vmem>>, %arg3: memref<1x128xf32, #tpu.memory_space<vmem>>, %arg4: memref<128x128xbf16, #tpu.memory_space<vmem>>, %arg5: memref<1x128xf32, #tpu.memory_space<vmem>>, %arg6: memref<1x128xf32, #tpu.memory_space<vmem>>, %arg7: memref<1x128xf32, #tpu.memory_space<vmem>>) attributes {dimension_semantics = [#tpu.dimension_semantics<arbitrary>], iteration_bounds = array<i64: 3>, scalar_prefetch = 0 : i64, scratch_operands = 1 : i64, tpu.core_type = #tpu.core_type<tc>, window_params = [{transform_indices = @transform_0, window_bounds = array<i64: 64, 32>}, {pipeline_mode = #tpu.pipeline_mode<synchronous>, transform_indices = @transform_1, window_bounds = array<i64: 32, 128>}, {pipeline_mode = #tpu.pipeline_mode<synchronous>, transform_indices = @transform_2, window_bounds = array<i64: 1, 128>}, {pipeline_mode = #tpu.pipeline_mode<synchronous>, transform_indices = @transform_3, window_bounds = array<i64: 128, 128>}, {pipeline_mode = #tpu.pipeline_mode<synchronous>, transform_indices = @transform_4, window_bounds = array<i64: 1, 128>}, {pipeline_mode = #tpu.pipeline_mode<synchronous>, transform_indices = @transform_5, window_bounds = array<i64: 1, 128>}]} {
    %c0_i32 = arith.constant 0 : i32
    %0 = arith.cmpi eq, %arg0, %c0_i32 : i32
    %1 = arith.extui %0 : i1 to i32
    %c0_i32_0 = arith.constant 0 : i32
    %2 = arith.cmpi ne, %1, %c0_i32_0 : i32
    scf.if %2 {
      %cst_29 = arith.constant 0.000000e+00 : f32
      %69 = vector.broadcast %cst_29 : f32 to vector<1x128xf32>
      %c0_30 = arith.constant 0 : index
      %c0_31 = arith.constant 0 : index
      %70 = vector.load %arg7[%c0_30, %c0_31] : memref<1x128xf32, #tpu.memory_space<vmem>>, vector<1x128xf32>
      tpu.vector_store %arg7[%c0_30, %c0_31], %69 {strides = array<i32>} : memref<1x128xf32, #tpu.memory_space<vmem>>, vector<1x128xf32>,
    } else {
    }
    %c0 = arith.constant 0 : index
    %c0_1 = arith.constant 0 : index
    %3 = vector.load %arg1[%c0, %c0_1] : memref<64x32xbf16, #tpu.memory_space<vmem>>, vector<64x32xbf16>
    %c0_2 = arith.constant 0 : index
    %c0_3 = arith.constant 0 : index
    %4 = vector.load %arg2[%c0_2, %c0_3] : memref<32x128xbf16, #tpu.memory_space<vmem>>, vector<32x128xbf16>
    %cst = arith.constant dense<0.000000e+00> : vector<64x128xf32>
    %5 = tpu.matmul %3, %4, %cst {dimension_numbers = #tpu.dot_dimension_numbers<[1], [0], [0], [1], [0, 0, 1, 1], [], []>} : vector<64x32xbf16>, vector<32x128xbf16>, vector<64x128xf32> -> vector<64x128xf32>
    %c0_4 = arith.constant 0 : index
    %c0_5 = arith.constant 0 : index
    %6 = vector.load %arg3[%c0_4, %c0_5] : memref<1x128xf32, #tpu.memory_space<vmem>>, vector<1x128xf32>
    %7 = vector.broadcast %6 : vector<1x128xf32> to vector<64x128xf32>
    %8 = arith.addf %5, %7 : vector<64x128xf32>
    %cst_6 = arith.constant 5.000000e-01 : f32
    %9 = vector.broadcast %cst_6 : f32 to vector<64x128xf32>
    %10 = arith.mulf %9, %8 : vector<64x128xf32>
    %cst_7 = arith.constant 0.707106769 : f32
    %11 = vector.broadcast %cst_7 : f32 to vector<64x128xf32>
    %12 = arith.mulf %8, %11 : vector<64x128xf32>
    %cst_8 = arith.constant 0.000000e+00 : f32
    %13 = vector.broadcast %cst_8 : f32 to vector<64x128xf32>
    %14 = arith.cmpf oge, %12, %13 : vector<64x128xf32>
    %cst_9 = arith.constant 1.000000e+00 : f32
    %cst_10 = arith.constant -1.000000e+00 : f32
    %15 = vector.broadcast %cst_9 : f32 to vector<64x128xf32>
    %16 = vector.broadcast %cst_10 : f32 to vector<64x128xf32>
    %17 = arith.select %14, %15, %16 : vector<64x128xi1>, vector<64x128xf32>
    %18 = math.absf %12 : vector<64x128xf32>
    %cst_11 = arith.constant 0.327591091 : f32
    %19 = vector.broadcast %cst_11 : f32 to vector<64x128xf32>
    %20 = arith.mulf %19, %18 : vector<64x128xf32>
    %cst_12 = arith.constant 1.000000e+00 : f32
    %21 = vector.broadcast %cst_12 : f32 to vector<64x128xf32>
    %22 = arith.addf %21, %20 : vector<64x128xf32>
    %23 = tpu.reciprocal %22 {approx = true} : vector<64x128xf32> -> vector<64x128xf32>
    %24 = arith.mulf %22, %23 : vector<64x128xf32>
    %cst_13 = arith.constant 2.000000e+00 : f32
    %25 = vector.broadcast %cst_13 : f32 to vector<64x128xf32>
    %26 = arith.subf %25, %24 : vector<64x128xf32>
    %27 = arith.mulf %23, %26 : vector<64x128xf32>
    %cst_14 = arith.constant 1.06140542 : f32
    %28 = vector.broadcast %cst_14 : f32 to vector<64x128xf32>
    %29 = arith.mulf %28, %27 : vector<64x128xf32>
    %cst_15 = arith.constant -1.45315206 : f32
    %30 = vector.broadcast %cst_15 : f32 to vector<64x128xf32>
    %31 = arith.addf %29, %30 : vector<64x128xf32>
    %32 = arith.mulf %31, %27 : vector<64x128xf32>
    %cst_16 = arith.constant 1.42141378 : f32
    %33 = vector.broadcast %cst_16 : f32 to vector<64x128xf32>
    %34 = arith.addf %32, %33 : vector<64x128xf32>
    %35 = arith.mulf %34, %27 : vector<64x128xf32>
    %cst_17 = arith.constant -0.284496725 : f32
    %36 = vector.broadcast %cst_17 : f32 to vector<64x128xf32>
    %37 = arith.addf %35, %36 : vector<64x128xf32>
    %38 = arith.mulf %37, %27 : vector<64x128xf32>
    %cst_18 = arith.constant 0.254829586 : f32
    %39 = vector.broadcast %cst_18 : f32 to vector<64x128xf32>
    %40 = arith.addf %38, %39 : vector<64x128xf32>
    %41 = arith.mulf %40, %27 : vector<64x128xf32>
    %cst_19 = arith.constant 0.000000e+00 : f32
    %42 = vector.broadcast %cst_19 : f32 to vector<64x128xf32>
    %43 = arith.subf %42, %18 : vector<64x128xf32>
    %44 = arith.mulf %43, %18 : vector<64x128xf32>
    %45 = math.exp %44 : vector<64x128xf32>
    %46 = arith.mulf %41, %45 : vector<64x128xf32>
    %cst_20 = arith.constant 1.000000e+00 : f32
    %47 = vector.broadcast %cst_20 : f32 to vector<64x128xf32>
    %48 = arith.subf %47, %46 : vector<64x128xf32>
    %49 = arith.mulf %17, %48 : vector<64x128xf32>
    %cst_21 = arith.constant 1.000000e+00 : f32
    %50 = vector.broadcast %cst_21 : f32 to vector<64x128xf32>
    %51 = arith.addf %50, %49 : vector<64x128xf32>
    %52 = arith.mulf %10, %51 : vector<64x128xf32>
    %c64_i32 = arith.constant 64 : i32
    %53 = arith.muli %arg0, %c64_i32 : i32
    %54 = tpu.iota {dimensions = array<i32: 0>} : vector<64x128xi32>
    %55 = vector.broadcast %53 : i32 to vector<64x128xi32>
    %56 = arith.addi %55, %54 : vector<64x128xi32>
    %c160_i32 = arith.constant 160 : i32
    %57 = vector.broadcast %c160_i32 : i32 to vector<64x128xi32>
    %58 = arith.cmpi slt, %56, %57 : vector<64x128xi32>
    %cst_22 = arith.constant 0.000000e+00 : f32
    %59 = vector.broadcast %cst_22 : f32 to vector<64x128xf32>
    %60 = arith.select %58, %52, %59 : vector<64x128xi1>, vector<64x128xf32>
    %c0_23 = arith.constant 0 : index
    %c0_24 = arith.constant 0 : index
    %61 = vector.load %arg7[%c0_23, %c0_24] : memref<1x128xf32, #tpu.memory_space<vmem>>, vector<1x128xf32>
    %cst_25 = arith.constant dense<0.000000e+00> : vector<128xf32>
    %62 = vector.multi_reduction <add>, %60, %cst_25 [0] : vector<64x128xf32> to vector<128xf32>
    %63 = vector.shape_cast %62 : vector<128xf32> to vector<1x128xf32>
    %64 = arith.addf %61, %63 : vector<1x128xf32>
    %c0_26 = arith.constant 0 : index
    %c0_27 = arith.constant 0 : index
    %65 = vector.load %arg7[%c0_26, %c0_27] : memref<1x128xf32, #tpu.memory_space<vmem>>, vector<1x128xf32>
    tpu.vector_store %arg7[%c0_26, %c0_27], %64 {strides = array<i32>} : memref<1x128xf32, #tpu.memory_space<vmem>>, vector<1x128xf32>,
    %c2_i32 = arith.constant 2 : i32
    %66 = arith.cmpi eq, %arg0, %c2_i32 : i32
    %67 = arith.extui %66 : i1 to i32
    %c0_i32_28 = arith.constant 0 : i32
    %68 = arith.cmpi ne, %67, %c0_i32_28 : i32
    scf.if %68 {
      %c0_29 = arith.constant 0 : index
      %c0_30 = arith.constant 0 : index
      %69 = vector.load %arg4[%c0_29, %c0_30] : memref<128x128xbf16, #tpu.memory_space<vmem>>, vector<128x128xbf16>
      %70 = arith.extf %69 : vector<128x128xbf16> to vector<128x128xf32>
      %c0_31 = arith.constant 0 : index
      %c0_32 = arith.constant 0 : index
      %71 = vector.load %arg7[%c0_31, %c0_32] : memref<1x128xf32, #tpu.memory_space<vmem>>, vector<1x128xf32>
      %cst_33 = arith.constant dense<0.000000e+00> : vector<1x128xf32>
      %72 = tpu.matmul %71, %70, %cst_33 {dimension_numbers = #tpu.dot_dimension_numbers<[1], [0], [0], [1], [0, 0, 1, 1], [], []>} : vector<1x128xf32>, vector<128x128xf32>, vector<1x128xf32> -> vector<1x128xf32>
      %c0_34 = arith.constant 0 : index
      %c0_35 = arith.constant 0 : index
      %73 = vector.load %arg5[%c0_34, %c0_35] : memref<1x128xf32, #tpu.memory_space<vmem>>, vector<1x128xf32>
      %cst_36 = arith.constant 1.600000e+02 : f32
      %74 = vector.broadcast %cst_36 : f32 to vector<1x128xf32>
      %75 = arith.mulf %74, %73 : vector<1x128xf32>
      %76 = arith.addf %72, %75 : vector<1x128xf32>
      %c0_37 = arith.constant 0 : index
      %c0_38 = arith.constant 0 : index
      %77 = vector.load %arg6[%c0_37, %c0_38] : memref<1x128xf32, #tpu.memory_space<vmem>>, vector<1x128xf32>
      tpu.vector_store %arg6[%c0_37, %c0_38], %76 {strides = array<i32>} : memref<1x128xf32, #tpu.memory_space<vmem>>, vector<1x128xf32>,
    } else {
    }
    return
  }
  func.func @transform_0(%arg0: i32) -> (i32, i32) {
    %c0_i32 = arith.constant 0 : i32
    %c0_i32_0 = arith.constant 0 : i32
    return %arg0, %c0_i32 : i32, i32
  }
  func.func @transform_1(%arg0: i32) -> (i32, i32) {
    %c0_i32 = arith.constant 0 : i32
    %c0_i32_0 = arith.constant 0 : i32
    %c0_i32_1 = arith.constant 0 : i32
    return %c0_i32, %c0_i32_0 : i32, i32
  }
  func.func @transform_2(%arg0: i32) -> (i32, i32) {
    %c0_i32 = arith.constant 0 : i32
    %c0_i32_0 = arith.constant 0 : i32
    %c0_i32_1 = arith.constant 0 : i32
    return %c0_i32, %c0_i32_0 : i32, i32
  }
  func.func @transform_3(%arg0: i32) -> (i32, i32) {
    %c0_i32 = arith.constant 0 : i32
    %c0_i32_0 = arith.constant 0 : i32
    %c0_i32_1 = arith.constant 0 : i32
    return %c0_i32, %c0_i32_0 : i32, i32
  }
  func.func @transform_4(%arg0: i32) -> (i32, i32) {
    %c0_i32 = arith.constant 0 : i32
    %c0_i32_0 = arith.constant 0 : i32
    %c0_i32_1 = arith.constant 0 : i32
    return %c0_i32, %c0_i32_0 : i32, i32
  }
  func.func @transform_5(%arg0: i32) -> (i32, i32) {
    %c0_i32 = arith.constant 0 : i32
    %c0_i32_0 = arith.constant 0 : i32
    %c0_i32_1 = arith.constant 0 : i32
    return %c0_i32, %c0_i32_0 : i32, i32
  }
}

</mosaic_0001>

<llo_original>
// kernel: mlp_aligner_forward.1
$region0: #{mlp_aligner_forward.1}
  #allocation0 [shape = 'u32[]', space=smem, size = 0x4, offset = 0x4, fixed_abs, tag = 'smem constant byte address 0x4 - core index']
  #allocation1 [shape = 'u32[144,128]{1,0:T(1,128)}', space=vmem, size = 0x12000, scoped, tag = 'internal scratch']
  #allocation2 [shape = 'f32[1,128]{1,0:T(1,128)}', space=vmem, size = 0x200, scoped, tag = 'scratch operand']
  %s0 = inlined_call_operand.vmem [shape: bf16[160,32], index: 0, kind: input, shape index: {}]
  %s1 = inlined_call_operand.vmem [shape: bf16[32,128], index: 1, kind: input, shape index: {}]
  %s2 = inlined_call_operand.vmem [shape: f32[1,128], index: 2, kind: input, shape index: {}]
  %s3 = inlined_call_operand.vmem [shape: bf16[128,128], index: 3, kind: input, shape index: {}]
  %s4 = inlined_call_operand.vmem [shape: f32[1,128], index: 4, kind: input, shape index: {}]
  %s5 = inlined_call_operand.vmem [shape: f32[1,128], index: 5, kind: output, shape index: {}]
  %s6 = sld [smem:[#allocation0]]
  $region61: #{mlp_aligner_forward.1} parent=0
    _
  %s8 = ssub.s32 1, %s6
  %s9 = scalar_select 0, %s8, %s6
  loop: start=0, step=1, limit=5
  $region2: #{mlp_aligner_forward.1} parent=0 // loop_pre_header
    _
  $region3: #{mlp_aligner_forward.1} parent=0 // loop_header
    %s11 = sphi 0, %s15
    %p12 = scmp.ge.s32.totalorder %s11, 5
    %s21 = sphi 0, %s23
    %s24 = sphi 0, %s21
    %s25 = sphi 0, %s24
    %s41 = sphi 0, %s25
    %s45 = sphi 0, %s45
    %s47 = sphi 0, %s45
    %s48 = sphi 0, %s47
    %s62 = sphi 0, %s48
    %s66 = sphi 0, %s66
    %s68 = sphi 0, %s66
    %s69 = sphi 0, %s68
    %s83 = sphi 0, %s69
    %s87 = sphi 0, %s87
    %s89 = sphi 0, %s87
    %s90 = sphi 0, %s89
    %s104 = sphi 0, %s90
    %s108 = sphi 0, %s108
    %s110 = sphi 0, %s108
    %s111 = sphi 0, %s110
    %s125 = sphi 0, %s111
    %s129 = sphi 0, %s129
    %s131 = sphi 0, %s129
    %s132 = sphi 0, %s131
    %s146 = sphi 0, %s132
  $region4: #{mlp_aligner_forward.1} parent=0 // loop_header_branch
    %14 = sbr.rel (%p12) target = $region8
  $region5: #{mlp_aligner_forward.1} parent=0 // loop_body
    %s16 = ssub.s32 %s11, 1
    %s17 = ssub.s32 %s11, 2
    %s18 = sadd.s32 %s11, 1
    %s19 = ssub.s32 %s11, %s18
    %p20 = scmp.eq.s32.totalorder %s19, 0
    %s22 = sadd.s32 %s21, 1
    %s23 = scalar_select %p20, %s21, %s22
    %p26 = pneg %p20
    %p27 = scmp.eq.s32.totalorder %s11, 2
    %p28 = por %p26, %p27
    %p29 = scmp.ne.s32.totalorder %s21, %s24
    %p30 = scmp.eq.s32.totalorder %s11, 0
    %p31 = por %p29, %p30
    %p32 = scmp.ne.s32.totalorder %s21, %s24
    %p33 = scmp.eq.s32.totalorder %s16, 2
    %p34 = por %p32, %p33
    %p35 = scmp.ne.s32.totalorder %s24, %s25
    %p36 = scmp.eq.s32.totalorder %s16, 0
    %p37 = por %p35, %p36
    %p38 = scmp.ne.s32.totalorder %s24, %s25
    %p39 = scmp.eq.s32.totalorder %s17, 2
    %p40 = por %p38, %p39
    %p42 = scmp.ne.s32.totalorder %s25, %s41
    %p43 = scmp.eq.s32.totalorder %s17, 0
    %p44 = por %p42, %p43
    %s46 = sadd.s32 %s45, 1
    %p49 = scmp.eq.s32.totalorder %s11, 2
    %p50 = scmp.ne.s32.totalorder %s45, %s47
    %p51 = scmp.eq.s32.totalorder %s11, 0
    %p52 = por %p50, %p51
    %p53 = scmp.ne.s32.totalorder %s45, %s47
    %p54 = scmp.eq.s32.totalorder %s16, 2
    %p55 = por %p53, %p54
    %p56 = scmp.ne.s32.totalorder %s47, %s48
    %p57 = scmp.eq.s32.totalorder %s16, 0
    %p58 = por %p56, %p57
    %p59 = scmp.ne.s32.totalorder %s47, %s48
    %p60 = scmp.eq.s32.totalorder %s17, 2
    %p61 = por %p59, %p60
    %p63 = scmp.ne.s32.totalorder %s48, %s62
    %p64 = scmp.eq.s32.totalorder %s17, 0
    %p65 = por %p63, %p64
    %s67 = sadd.s32 %s66, 1
    %p70 = scmp.eq.s32.totalorder %s11, 2
    %p71 = scmp.ne.s32.totalorder %s66, %s68
    %p72 = scmp.eq.s32.totalorder %s11, 0
    %p73 = por %p71, %p72
    %p74 = scmp.ne.s32.totalorder %s66, %s68
    %p75 = scmp.eq.s32.totalorder %s16, 2
    %p76 = por %p74, %p75
    %p77 = scmp.ne.s32.totalorder %s68, %s69
    %p78 = scmp.eq.s32.totalorder %s16, 0
    %p79 = por %p77, %p78
    %p80 = scmp.ne.s32.totalorder %s68, %s69
    %p81 = scmp.eq.s32.totalorder %s17, 2
    %p82 = por %p80, %p81
    %p84 = scmp.ne.s32.totalorder %s69, %s83
    %p85 = scmp.eq.s32.totalorder %s17, 0
    %p86 = por %p84, %p85
    %s88 = sadd.s32 %s87, 1
    %p91 = scmp.eq.s32.totalorder %s11, 2
    %p92 = scmp.ne.s32.totalorder %s87, %s89
    %p93 = scmp.eq.s32.totalorder %s11, 0
    %p94 = por %p92, %p93
    %p95 = scmp.ne.s32.totalorder %s87, %s89
    %p96 = scmp.eq.s32.totalorder %s16, 2
    %p97 = por %p95, %p96
    %p98 = scmp.ne.s32.totalorder %s89, %s90
    %p99 = scmp.eq.s32.totalorder %s16, 0
    %p100 = por %p98, %p99
    %p101 = scmp.ne.s32.totalorder %s89, %s90
    %p102 = scmp.eq.s32.totalorder %s17, 2
    %p103 = por %p101, %p102
    %p105 = scmp.ne.s32.totalorder %s90, %s104
    %p106 = scmp.eq.s32.totalorder %s17, 0
    %p107 = por %p105, %p106
    %s109 = sadd.s32 %s108, 1
    %p112 = scmp.eq.s32.totalorder %s11, 2
    %p113 = scmp.ne.s32.totalorder %s108, %s110
    %p114 = scmp.eq.s32.totalorder %s11, 0
    %p115 = por %p113, %p114
    %p116 = scmp.ne.s32.totalorder %s108, %s110
    %p117 = scmp.eq.s32.totalorder %s16, 2
    %p118 = por %p116, %p117
    %p119 = scmp.ne.s32.totalorder %s110, %s111
    %p120 = scmp.eq.s32.totalorder %s16, 0
    %p121 = por %p119, %p120
    %p122 = scmp.ne.s32.totalorder %s110, %s111
    %p123 = scmp.eq.s32.totalorder %s17, 2
    %p124 = por %p122, %p123
    %p126 = scmp.ne.s32.totalorder %s111, %s125
    %p127 = scmp.eq.s32.totalorder %s17, 0
    %p128 = por %p126, %p127
    %s130 = sadd.s32 %s129, 1
    %p133 = scmp.eq.s32.totalorder %s11, 2
    %p134 = scmp.ne.s32.totalorder %s129, %s131
    %p135 = scmp.eq.s32.totalorder %s11, 0
    %p136 = por %p134, %p135
    %p137 = scmp.ne.s32.totalorder %s129, %s131
    %p138 = scmp.eq.s32.totalorder %s16, 2
    %p139 = por %p137, %p138
    %p140 = scmp.ne.s32.totalorder %s131, %s132
    %p141 = scmp.eq.s32.totalorder %s16, 0
    %p142 = por %p140, %p141
    %p143 = scmp.ne.s32.totalorder %s131, %s132
    %p144 = scmp.eq.s32.totalorder %s17, 2
    %p145 = por %p143, %p144
    %p147 = scmp.ne.s32.totalorder %s132, %s146
    %p148 = scmp.eq.s32.totalorder %s17, 0
    %p149 = por %p147, %p148
    %p150 = scmp.le.s32.totalorder 1, %s11
    %p151 = scmp.lt.s32.totalorder %s11, 4
    %p152 = pnand %p150, %p151
    %p153 = pneg %p152
    // Predicated region
    $region9: #{mlp_aligner_forward.1} parent=5 // pred_check
      _
    $region10: #{mlp_aligner_forward.1} parent=5 // pred_check_branch
      %155 = sbr.rel (%p152) target = $region12
    $region11: #{mlp_aligner_forward.1} parent=5 // pred_region
      %s156 = ssub.s32 %s11, 1
      // Predicated region
      $region13: #{mlp_aligner_forward.1} parent=11 // pred_check
        %p157 = pneg %p58
      $region14: #{mlp_aligner_forward.1} parent=11 // pred_check_branch
        %159 = sbr.rel (%p157) target = $region16
      $region15: #{mlp_aligner_forward.1} parent=11 // pred_region
        _
      $region16: #{mlp_aligner_forward.1} parent=11 // pred_fallthru
        _
      // Predicated region
      $region17: #{mlp_aligner_forward.1} parent=11 // pred_check
        %p160 = pneg %p79
      $region18: #{mlp_aligner_forward.1} parent=11 // pred_check_branch
        %162 = sbr.rel (%p160) target = $region20
      $region19: #{mlp_aligner_forward.1} parent=11 // pred_region
        _
      $region20: #{mlp_aligner_forward.1} parent=11 // pred_fallthru
        _
      // Predicated region
      $region21: #{mlp_aligner_forward.1} parent=11 // pred_check
        %p163 = pneg %p100
      $region22: #{mlp_aligner_forward.1} parent=11 // pred_check_branch
        %165 = sbr.rel (%p163) target = $region24
      $region23: #{mlp_aligner_forward.1} parent=11 // pred_region
        _
      $region24: #{mlp_aligner_forward.1} parent=11 // pred_fallthru
        _
      // Predicated region
      $region25: #{mlp_aligner_forward.1} parent=11 // pred_check
        %p166 = pneg %p121
      $region26: #{mlp_aligner_forward.1} parent=11 // pred_check_branch
        %168 = sbr.rel (%p166) target = $region28
      $region27: #{mlp_aligner_forward.1} parent=11 // pred_region
        _
      $region28: #{mlp_aligner_forward.1} parent=11 // pred_fallthru
        _
    $region12: #{mlp_aligner_forward.1} parent=5 // pred_fallthru
      _
    %p169 = scmp.lt.s32.totalorder %s11, 3
    // Predicated region
    $region29: #{mlp_aligner_forward.1} parent=5 // pred_check
      %p170 = pneg %p169
    $region30: #{mlp_aligner_forward.1} parent=5 // pred_check_branch
      %172 = sbr.rel (%p170) target = $region32
    $region31: #{mlp_aligner_forward.1} parent=5 // pred_region
      // Predicated region
      $region33: #{mlp_aligner_forward.1} parent=31 // pred_check
        %p173 = pneg %p31
      $region34: #{mlp_aligner_forward.1} parent=31 // pred_check_branch
        %175 = sbr.rel (%p173) target = $region36
      $region35: #{mlp_aligner_forward.1} parent=31 // pred_region
        %s176 = smul.u32 8, %s11
        %s177 = ssub.s32 20, %s176
        %p178 = scmp.lt.s32.totalorder %s177, 8
        %s179 = scalar_select %p178, %s177, 8
        %s180 = smul.u32 64, %s179
        %p181 = scmp.lt.s32.totalorder %s176, 19
        %s182 = scalar_select %p181, %s176, 19
        %s183 = smul.addr %s182, 4
        %s184 = scalar_lea.vmem %s0, %s183
        %s185 = smul.u32 8, %s11
        %s186 = ssub.s32 20, %s185
        %p187 = scmp.lt.s32.totalorder %s186, 8
        %s188 = scalar_select %p187, %s186, 8
        %s189 = smul.u32 64, %s188
      $region36: #{mlp_aligner_forward.1} parent=31 // pred_fallthru
        _
    $region32: #{mlp_aligner_forward.1} parent=5 // pred_fallthru
      _
    %p190 = scmp.le.s32.totalorder 1, %s11
    %p191 = scmp.lt.s32.totalorder %s11, 4
    %p192 = pnand %p190, %p191
    %p193 = pneg %p192
    // Predicated region
    $region37: #{mlp_aligner_forward.1} parent=5 // pred_check
      _
    $region38: #{mlp_aligner_forward.1} parent=5 // pred_check_branch
      %195 = sbr.rel (%p192) target = $region40
    $region39: #{mlp_aligner_forward.1} parent=5 // pred_region
      %s196 = ssub.s32 %s11, 1
      %s197 = smul.u32 8, %s16
      %s198 = ssub.s32 20, %s197
      %p199 = scmp.lt.s32.totalorder %s198, 8
      %s200 = scalar_select %p199, %s198, 8
      %s201 = smul.u32 64, %s200
      %p202 = scmp.lt.s32.totalorder %s197, 19
      %s203 = scalar_select %p202, %s197, 19
      %s204 = smul.addr %s203, 4
      %s205 = scalar_lea.vmem %s0, %s204
      %p206 = pneg %p37
      %p207 = pneg %p34
      %p208 = pneg %p58
      %p209 = pneg %p55
      %p210 = pneg %p79
      %p211 = pneg %p76
      %p212 = pneg %p100
      %p213 = pneg %p97
      %p214 = pneg %p121
      %p215 = pneg %p118
      %p216 = pneg %p142
      %p217 = pneg %p139
      %s218 = smul.u32 8, %s16
      %s219 = ssub.s32 20, %s218
      %p220 = scmp.lt.s32.totalorder %s219, 8
      %s221 = scalar_select %p220, %s219, 8
      %s222 = smul.u32 64, %s221
      %p223 = scmp.lt.s32.totalorder %s218, 19
      %s224 = scalar_select %p223, %s218, 19
      %s225 = smul.addr %s224, 4
      %s226 = scalar_lea.vmem %s0, %s225
      %s227 = smul.u32 8, %s16
      %s228 = ssub.s32 20, %s227
      %p229 = scmp.lt.s32.totalorder %s228, 8
      %s230 = scalar_select %p229, %s228, 8
      %s231 = smul.u32 64, %s230
      %p233 = scmp.eq.s32.totalorder %s16, 0
      // Predicated region
      $region41: #{mlp_aligner_forward.1} parent=39 // pred_check
        %p234 = pneg %p233
      $region42: #{mlp_aligner_forward.1} parent=39 // pred_check_branch
        %236 = sbr.rel (%p234) target = $region44
      $region43: #{mlp_aligner_forward.1} parent=39 // pred_region
        %237 = vst [vmem:[#allocation2] sm:$0x1] 0.0
      $region44: #{mlp_aligner_forward.1} parent=39 // pred_fallthru
        _
      %v238 = vld [vmem:[%s226] sm:$0xf]
      %v239 = vld [vmem:[%s226 + $0x4] sm:$0xf]
      %v240 = vld [vmem:[%s226 + $0x8] sm:$0xf]
      %v241 = vld [vmem:[%s226 + $0xc] sm:$0xf]
      %v242 = vld [vmem:[%s226 + $0x10] sm:$0xf]
      %v243 = vld [vmem:[%s226 + $0x14] sm:$0xf]
      %v244 = vld [vmem:[%s226 + $0x18] sm:$0xf]
      %v245 = vld [vmem:[%s226 + $0x1c] sm:$0xf]
      %v246 = vld [vmem:[%s1] sm:$0xf]
      %v247 = vld [vmem:[%s1 + $0x4] sm:$0xf]
      %v248 = vld [vmem:[%s1 + $0x8] sm:$0xf]
      %v249 = vld [vmem:[%s1 + $0xc] sm:$0xf]
      %v250 = vld [vmem:[%s2] sm:$0x1]
      %v252 = vlaneseq
      %v253 = vshrl.u32 %v252, 7
      %v254 = vsub.s32 0, %v253
      %v255 = vrot.slane %v250, %v254
      %v265 = vunpack.c.l.b16 %v238
      %v266 = vunpack.c.l.b16 %v239
      %v267 = vunpack.c.l.b16 %v240
      %v268 = vunpack.c.l.b16 %v241
      %v269 = vunpack.c.l.b16 %v242
      %v270 = vunpack.c.l.b16 %v243
      %v271 = vunpack.c.l.b16 %v244
      %v272 = vunpack.c.l.b16 %v245
      %v273 = vpack.c.b16 %v266, %v265
      %v274 = vpack.c.b16 %v268, %v267
      %v275 = vpack.c.b16 %v270, %v269
      %v276 = vpack.c.b16 %v272, %v271
      %v281 = vunpack.c.l.b16 %v246
      %v282 = vunpack.c.l.b16 %v247
      %v283 = vunpack.c.l.b16 %v248
      %v284 = vunpack.c.l.b16 %v249
      %v285 = vpack.c.b16 %v282, %v281
      %v286 = vpack.c.b16 %v284, %v283
      %vm289 = vcmask 261120
      %v291 = vsel %vm289, %v273, 0
      %v294 = vsel %vm289, %v274, 0
      %v297 = vsel %vm289, %v275, 0
      %v300 = vsel %vm289, %v276, 0
      %302 = vmatprep.subr.bf16.mxu0 0
      %303 = vmatpush1.bf16.msra.mxu0 %v285
      %304 = vmatprep.subr.bf16.mxu0 0
      %305 = vmatpush1.bf16.msra.mxu0 %v286
      %306 = vmatprep.subr.bf16.mxu0 0
      %307 = vmatpush1.bf16.msra.mxu0 0
      %308 = vmatprep.subr.bf16.mxu0 0
      %309 = vmatpush1.bf16.msra.mxu0 0
      %310 = vmatprep.subr.bf16.mxu0 0
      %311 = vmatpush1.bf16.msra.mxu0 0
      %312 = vmatprep.subr.bf16.mxu0 0
      %313 = vmatpush1.bf16.msra.mxu0 0
      %314 = vmatprep.subr.bf16.mxu0 0
      %315 = vmatpush1.bf16.msra.mxu0 0
      %316 = vmatprep.subr.bf16.mxu0 0
      %317 = vmatpush1.bf16.msra.mxu0 0
      %318 = vmatprep.subr.bf16.mxu0 0
      %319 = vmatpush1.bf16.msra.mxu0 0
      %320 = vmatprep.subr.bf16.mxu0 0
      %321 = vmatpush1.bf16.msra.mxu0 0
      %322 = vmatprep.subr.bf16.mxu0 0
      %323 = vmatpush1.bf16.msra.mxu0 0
      %324 = vmatprep.subr.bf16.mxu0 0
      %325 = vmatpush1.bf16.msra.mxu0 0
      %326 = vmatprep.subr.bf16.mxu0 0
      %327 = vmatpush1.bf16.msra.mxu0 0
      %328 = vmatprep.subr.bf16.mxu0 0
      %329 = vmatpush1.bf16.msra.mxu0 0
      %330 = vmatprep.subr.bf16.mxu0 0
      %331 = vmatpush1.bf16.msra.mxu0 0
      %332 = vmatprep.subr.bf16.mxu0 0
      %333 = vmatpush1.bf16.msra.mxu0 0
      %334 = vmatprep.mubr.bf16.mxu0 0
      %335 = vmatmul.mubr.bf16.gmra.mrb[0].mxu0 %v291
      %v336 = vpop.f32.mrb[0].mxu0
      %v337 = vadd.f32 %v255, %v336
      %v338 = vpop.f32.mrb[0].mxu0
      %v339 = vpop.f32.mrb[0].mxu0
      %v340 = vadd.f32 %v255, %v339
      %v341 = vpop.f32.mrb[0].mxu0
      %342 = vmatprep.mubr.bf16.mxu0 0
      %343 = vmatmul.mubr.bf16.gmra.mrb[0].mxu0 %v294
      %v344 = vpop.f32.mrb[0].mxu0
      %v345 = vadd.f32 %v255, %v344
      %v346 = vpop.f32.mrb[0].mxu0
      %v347 = vpop.f32.mrb[0].mxu0
      %v348 = vadd.f32 %v255, %v347
      %v349 = vpop.f32.mrb[0].mxu0
      %350 = vmatprep.mubr.bf16.mxu0 0
      %351 = vmatmul.mubr.bf16.gmra.mrb[0].mxu0 %v297
      %v352 = vpop.f32.mrb[0].mxu0
      %v353 = vadd.f32 %v255, %v352
      %v354 = vpop.f32.mrb[0].mxu0
      %v355 = vpop.f32.mrb[0].mxu0
      %v356 = vadd.f32 %v255, %v355
      %v357 = vpop.f32.mrb[0].mxu0
      %358 = vmatprep.mubr.bf16.mxu0 0
      %359 = vmatmul.mubr.bf16.gmra.mrb[0].mxu0 %v300
      %v360 = vpop.f32.mrb[0].mxu0
      %v361 = vadd.f32 %v255, %v360
      %v362 = vpop.f32.mrb[0].mxu0
      %v363 = vpop.f32.mrb[0].mxu0
      %v364 = vadd.f32 %v255, %v363
      %v365 = vpop.f32.mrb[0].mxu0
      %366 = vdwg.mxu0
      %v367 = vmul.f32 %v337, 0.5
      %v368 = vmul.f32 %v340, 0.5
      %v369 = vmul.f32 %v345, 0.5
      %v370 = vmul.f32 %v348, 0.5
      %v371 = vmul.f32 %v353, 0.5
      %v372 = vmul.f32 %v356, 0.5
      %v373 = vmul.f32 %v361, 0.5
      %v374 = vmul.f32 %v364, 0.5
      %v375 = vmul.f32 %v337, 0.70710677
      %v376 = vmul.f32 %v340, 0.70710677
      %v377 = vmul.f32 %v345, 0.70710677
      %v378 = vmul.f32 %v348, 0.70710677
      %v379 = vmul.f32 %v353, 0.70710677
      %v380 = vmul.f32 %v356, 0.70710677
      %v381 = vmul.f32 %v361, 0.70710677
      %v382 = vmul.f32 %v364, 0.70710677
      %vm383 = vcmp.ge.f32.partialorder %v375, 0.0
      %vm384 = vcmp.ge.f32.partialorder %v376, 0.0
      %vm385 = vcmp.ge.f32.partialorder %v377, 0.0
      %vm386 = vcmp.ge.f32.partialorder %v378, 0.0
      %vm387 = vcmp.ge.f32.partialorder %v379, 0.0
      %vm388 = vcmp.ge.f32.partialorder %v380, 0.0
      %vm389 = vcmp.ge.f32.partialorder %v381, 0.0
      %vm390 = vcmp.ge.f32.partialorder %v382, 0.0
      %v391 = vsel %vm383, 1.0, -1.0
      %v392 = vsel %vm384, 1.0, -1.0
      %v393 = vsel %vm385, 1.0, -1.0
      %v394 = vsel %vm386, 1.0, -1.0
      %v395 = vsel %vm387, 1.0, -1.0
      %v396 = vsel %vm388, 1.0, -1.0
      %v397 = vsel %vm389, 1.0, -1.0
      %v398 = vsel %vm390, 1.0, -1.0
      %v399 = vand.u32 2147483647, %v375
      %v400 = vand.u32 2147483647, %v376
      %v401 = vand.u32 2147483647, %v377
      %v402 = vand.u32 2147483647, %v378
      %v403 = vand.u32 2147483647, %v379
      %v404 = vand.u32 2147483647, %v380
      %v405 = vand.u32 2147483647, %v381
      %v406 = vand.u32 2147483647, %v382
      %v407 = vmul.f32 %v399, 0.3275911
      %v408 = vmul.f32 %v400, 0.3275911
      %v409 = vmul.f32 %v401, 0.3275911
      %v410 = vmul.f32 %v402, 0.3275911
      %v411 = vmul.f32 %v403, 0.3275911
      %v412 = vmul.f32 %v404, 0.3275911
      %v413 = vmul.f32 %v405, 0.3275911
      %v414 = vmul.f32 %v406, 0.3275911
      %v415 = vadd.f32 %v407, 1.0
      %v416 = vadd.f32 %v408, 1.0
      %v417 = vadd.f32 %v409, 1.0
      %v418 = vadd.f32 %v410, 1.0
      %v419 = vadd.f32 %v411, 1.0
      %v420 = vadd.f32 %v412, 1.0
      %v421 = vadd.f32 %v413, 1.0
      %v422 = vadd.f32 %v414, 1.0
      %v423 = vrcp.pop %v415
      %v424 = vrcp.pop %v416
      %v425 = vrcp.pop %v417
      %v426 = vrcp.pop %v418
      %v427 = vrcp.pop %v419
      %v428 = vrcp.pop %v420
      %v429 = vrcp.pop %v421
      %v430 = vrcp.pop %v422
      %v431 = vmul.f32 %v415, %v423
      %v432 = vmul.f32 %v416, %v424
      %v433 = vmul.f32 %v417, %v425
      %v434 = vmul.f32 %v418, %v426
      %v435 = vmul.f32 %v419, %v427
      %v436 = vmul.f32 %v420, %v428
      %v437 = vmul.f32 %v421, %v429
      %v438 = vmul.f32 %v422, %v430
      %v439 = vsub.f32 2.0, %v431
      %v440 = vsub.f32 2.0, %v432
      %v441 = vsub.f32 2.0, %v433
      %v442 = vsub.f32 2.0, %v434
      %v443 = vsub.f32 2.0, %v435
      %v444 = vsub.f32 2.0, %v436
      %v445 = vsub.f32 2.0, %v437
      %v446 = vsub.f32 2.0, %v438
      %v447 = vmul.f32 %v423, %v439
      %v448 = vmul.f32 %v424, %v440
      %v449 = vmul.f32 %v425, %v441
      %v450 = vmul.f32 %v426, %v442
      %v451 = vmul.f32 %v427, %v443
      %v452 = vmul.f32 %v428, %v444
      %v453 = vmul.f32 %v429, %v445
      %v454 = vmul.f32 %v430, %v446
      %v455 = vmul.f32 %v447, 1.0614054
      %v456 = vmul.f32 %v448, 1.0614054
      %v457 = vmul.f32 %v449, 1.0614054
      %v458 = vmul.f32 %v450, 1.0614054
      %v459 = vmul.f32 %v451, 1.0614054
      %v460 = vmul.f32 %v452, 1.0614054
      %v461 = vmul.f32 %v453, 1.0614054
      %v462 = vmul.f32 %v454, 1.0614054
      %v463 = vadd.f32 %v455, -1.4531521
      %v464 = vadd.f32 %v456, -1.4531521
      %v465 = vadd.f32 %v457, -1.4531521
      %v466 = vadd.f32 %v458, -1.4531521
      %v467 = vadd.f32 %v459, -1.4531521
      %v468 = vadd.f32 %v460, -1.4531521
      %v469 = vadd.f32 %v461, -1.4531521
      %v470 = vadd.f32 %v462, -1.4531521
      %v471 = vmul.f32 %v463, %v447
      %v472 = vmul.f32 %v464, %v448
      %v473 = vmul.f32 %v465, %v449
      %v474 = vmul.f32 %v466, %v450
      %v475 = vmul.f32 %v467, %v451
      %v476 = vmul.f32 %v468, %v452
      %v477 = vmul.f32 %v469, %v453
      %v478 = vmul.f32 %v470, %v454
      %v479 = vadd.f32 %v471, 1.4214138
      %v480 = vadd.f32 %v472, 1.4214138
      %v481 = vadd.f32 %v473, 1.4214138
      %v482 = vadd.f32 %v474, 1.4214138
      %v483 = vadd.f32 %v475, 1.4214138
      %v484 = vadd.f32 %v476, 1.4214138
      %v485 = vadd.f32 %v477, 1.4214138
      %v486 = vadd.f32 %v478, 1.4214138
      %v487 = vmul.f32 %v479, %v447
      %v488 = vmul.f32 %v480, %v448
      %v489 = vmul.f32 %v481, %v449
      %v490 = vmul.f32 %v482, %v450
      %v491 = vmul.f32 %v483, %v451
      %v492 = vmul.f32 %v484, %v452
      %v493 = vmul.f32 %v485, %v453
      %v494 = vmul.f32 %v486, %v454
      %v495 = vadd.f32 %v487, -0.28449672
      %v496 = vadd.f32 %v488, -0.28449672
      %v497 = vadd.f32 %v489, -0.28449672
      %v498 = vadd.f32 %v490, -0.28449672
      %v499 = vadd.f32 %v491, -0.28449672
      %v500 = vadd.f32 %v492, -0.28449672
      %v501 = vadd.f32 %v493, -0.28449672
      %v502 = vadd.f32 %v494, -0.28449672
      %v503 = vmul.f32 %v495, %v447
      %v504 = vmul.f32 %v496, %v448
      %v505 = vmul.f32 %v497, %v449
      %v506 = vmul.f32 %v498, %v450
      %v507 = vmul.f32 %v499, %v451
      %v508 = vmul.f32 %v500, %v452
      %v509 = vmul.f32 %v501, %v453
      %v510 = vmul.f32 %v502, %v454
      %v511 = vadd.f32 %v503, 0.2548296
      %v512 = vadd.f32 %v504, 0.2548296
      %v513 = vadd.f32 %v505, 0.2548296
      %v514 = vadd.f32 %v506, 0.2548296
      %v515 = vadd.f32 %v507, 0.2548296
      %v516 = vadd.f32 %v508, 0.2548296
      %v517 = vadd.f32 %v509, 0.2548296
      %v518 = vadd.f32 %v510, 0.2548296
      %v519 = vmul.f32 %v511, %v447
      %v520 = vmul.f32 %v512, %v448
      %v521 = vmul.f32 %v513, %v449
      %v522 = vmul.f32 %v514, %v450
      %v523 = vmul.f32 %v515, %v451
      %v524 = vmul.f32 %v516, %v452
      %v525 = vmul.f32 %v517, %v453
      %v526 = vmul.f32 %v518, %v454
      %v527 = vsub.f32 0.0, %v399
      %v528 = vsub.f32 0.0, %v400
      %v529 = vsub.f32 0.0, %v401
      %v530 = vsub.f32 0.0, %v402
      %v531 = vsub.f32 0.0, %v403
      %v532 = vsub.f32 0.0, %v404
      %v533 = vsub.f32 0.0, %v405
      %v534 = vsub.f32 0.0, %v406
      %v535 = vmul.f32 %v527, %v399
      %v536 = vmul.f32 %v528, %v400
      %v537 = vmul.f32 %v529, %v401
      %v538 = vmul.f32 %v530, %v402
      %v539 = vmul.f32 %v531, %v403
      %v540 = vmul.f32 %v532, %v404
      %v541 = vmul.f32 %v533, %v405
      %v542 = vmul.f32 %v534, %v406
      %v543 = vmul.f32 %v535, 1.442695
      %v544 = vpow.pop %v543
      %v545 = vmul.f32 %v536, 1.442695
      %v546 = vpow.pop %v545
      %v547 = vmul.f32 %v537, 1.442695
      %v548 = vpow.pop %v547
      %v549 = vmul.f32 %v538, 1.442695
      %v550 = vpow.pop %v549
      %v551 = vmul.f32 %v539, 1.442695
      %v552 = vpow.pop %v551
      %v553 = vmul.f32 %v540, 1.442695
      %v554 = vpow.pop %v553
      %v555 = vmul.f32 %v541, 1.442695
      %v556 = vpow.pop %v555
      %v557 = vmul.f32 %v542, 1.442695
      %v558 = vpow.pop %v557
      %v559 = vmul.f32 %v519, %v544
      %v560 = vmul.f32 %v520, %v546
      %v561 = vmul.f32 %v521, %v548
      %v562 = vmul.f32 %v522, %v550
      %v563 = vmul.f32 %v523, %v552
      %v564 = vmul.f32 %v524, %v554
      %v565 = vmul.f32 %v525, %v556
      %v566 = vmul.f32 %v526, %v558
      %v567 = vsub.f32 1.0, %v559
      %v568 = vsub.f32 1.0, %v560
      %v569 = vsub.f32 1.0, %v561
      %v570 = vsub.f32 1.0, %v562
      %v571 = vsub.f32 1.0, %v563
      %v572 = vsub.f32 1.0, %v564
      %v573 = vsub.f32 1.0, %v565
      %v574 = vsub.f32 1.0, %v566
      %v575 = vmul.f32 %v391, %v567
      %v576 = vmul.f32 %v392, %v568
      %v577 = vmul.f32 %v393, %v569
      %v578 = vmul.f32 %v394, %v570
      %v579 = vmul.f32 %v395, %v571
      %v580 = vmul.f32 %v396, %v572
      %v581 = vmul.f32 %v397, %v573
      %v582 = vmul.f32 %v398, %v574
      %v583 = vadd.f32 %v575, 1.0
      %v584 = vadd.f32 %v576, 1.0
      %v585 = vadd.f32 %v577, 1.0
      %v586 = vadd.f32 %v578, 1.0
      %v587 = vadd.f32 %v579, 1.0
      %v588 = vadd.f32 %v580, 1.0
      %v589 = vadd.f32 %v581, 1.0
      %v590 = vadd.f32 %v582, 1.0
      %v591 = vmul.f32 %v367, %v583
      %v592 = vmul.f32 %v368, %v584
      %v593 = vmul.f32 %v369, %v585
      %v594 = vmul.f32 %v370, %v586
      %v595 = vmul.f32 %v371, %v587
      %v596 = vmul.f32 %v372, %v588
      %v597 = vmul.f32 %v373, %v589
      %v598 = vmul.f32 %v374, %v590
      %s599 = smul.u32 %s16, 64
      %v600 = vlaneseq
      %v601 = vshrl.u32 %v600, 7
      %v602 = vadd.s32 %v601, 8
      %v603 = vadd.s32 %v601, 16
      %v604 = vadd.s32 %v601, 24
      %v605 = vadd.s32 %v601, 32
      %v606 = vadd.s32 %v601, 40
      %v607 = vadd.s32 %v601, 48
      %v608 = vadd.s32 %v601, 56
      %v609 = vstv %s599
      %v610 = vadd.s32 %v609, %v601
      %v611 = vadd.s32 %v609, %v602
      %v612 = vadd.s32 %v609, %v603
      %v613 = vadd.s32 %v609, %v604
      %v614 = vadd.s32 %v609, %v605
      %v615 = vadd.s32 %v609, %v606
      %v616 = vadd.s32 %v609, %v607
      %v617 = vadd.s32 %v609, %v608
      %vm618 = vcmp.lt.s32.totalorder %v610, 160
      %vm619 = vcmp.lt.s32.totalorder %v611, 160
      %vm620 = vcmp.lt.s32.totalorder %v612, 160
      %vm621 = vcmp.lt.s32.totalorder %v613, 160
      %vm622 = vcmp.lt.s32.totalorder %v614, 160
      %vm623 = vcmp.lt.s32.totalorder %v615, 160
      %vm624 = vcmp.lt.s32.totalorder %v616, 160
      %vm625 = vcmp.lt.s32.totalorder %v617, 160
      %v626 = vsel %vm618, %v591, 0.0
      %v627 = vsel %vm619, %v592, 0.0
      %v628 = vsel %vm620, %v593, 0.0
      %v629 = vsel %vm621, %v594, 0.0
      %v630 = vsel %vm622, %v595, 0.0
      %v631 = vsel %vm623, %v596, 0.0
      %v632 = vsel %vm624, %v597, 0.0
      %v633 = vsel %vm625, %v598, 0.0
      %v634 = vld [vmem:[#allocation2] sm:$0x1]
      %v635 = vadd.f32 %v626, %v627
      %v636 = vadd.f32 %v635, %v628
      %v637 = vadd.f32 %v636, %v629
      %v638 = vadd.f32 %v637, %v630
      %v639 = vadd.f32 %v638, %v631
      %v640 = vadd.f32 %v639, %v632
      %v641 = vadd.f32 %v640, %v633
      %v642 = vrot.slane %v641, 4
      %v643 = vadd.f32 %v641, %v642
      %v644 = vrot.slane %v643, 2
      %v645 = vadd.f32 %v643, %v644
      %v646 = vrot.slane %v645, 1
      %v647 = vadd.f32 %v645, %v646
      %v648 = vadd.f32 %v634, %v647
      %649 = vst [vmem:[#allocation2] sm:$0x1] %v648
      %p650 = scmp.eq.s32.totalorder %s16, 2
      // Predicated region
      $region45: #{mlp_aligner_forward.1} parent=39 // pred_check
        %p651 = pneg %p650
      $region46: #{mlp_aligner_forward.1} parent=39 // pred_check_branch
        %653 = sbr.rel (%p651) target = $region48
      $region47: #{mlp_aligner_forward.1} parent=39 // pred_region
        %v654 = vld [vmem:[%s3] sm:$0xf]
        %v655 = vld [vmem:[%s3 + $0x4] sm:$0xf]
        %v656 = vld [vmem:[%s3 + $0x8] sm:$0xf]
        %v657 = vld [vmem:[%s3 + $0xc] sm:$0xf]
        %v658 = vld [vmem:[%s3 + $0x10] sm:$0xf]
        %v659 = vld [vmem:[%s3 + $0x14] sm:$0xf]
        %v660 = vld [vmem:[%s3 + $0x18] sm:$0xf]
        %v661 = vld [vmem:[%s3 + $0x1c] sm:$0xf]
        %v662 = vld [vmem:[%s3 + $0x20] sm:$0xf]
        %v663 = vld [vmem:[%s3 + $0x24] sm:$0xf]
        %v664 = vld [vmem:[%s3 + $0x28] sm:$0xf]
        %v665 = vld [vmem:[%s3 + $0x2c] sm:$0xf]
        %v666 = vld [vmem:[%s3 + $0x30] sm:$0xf]
        %v667 = vld [vmem:[%s3 + $0x34] sm:$0xf]
        %v668 = vld [vmem:[%s3 + $0x38] sm:$0xf]
        %v669 = vld [vmem:[%s3 + $0x3c] sm:$0xf]
        %v670 = vunpack.c.l.bf16 %v654
        %v671 = vunpack.c.l.bf16 %v655
        %v672 = vunpack.c.l.bf16 %v656
        %v673 = vunpack.c.l.bf16 %v657
        %v674 = vunpack.c.l.bf16 %v658
        %v675 = vunpack.c.l.bf16 %v659
        %v676 = vunpack.c.l.bf16 %v660
        %v677 = vunpack.c.l.bf16 %v661
        %v678 = vunpack.c.l.bf16 %v662
        %v679 = vunpack.c.l.bf16 %v663
        %v680 = vunpack.c.l.bf16 %v664
        %v681 = vunpack.c.l.bf16 %v665
        %v682 = vunpack.c.l.bf16 %v666
        %v683 = vunpack.c.l.bf16 %v667
        %v684 = vunpack.c.l.bf16 %v668
        %v685 = vunpack.c.l.bf16 %v669
        %v686 = vld [vmem:[#allocation2] sm:$0x1]
        %v687 = vld [vmem:[%s4] sm:$0x1]
        %v688 = vmul.f32 %v687, 160.0
        %689 = vmatprep.subr.mxu0 0.0
        %690 = vmatpush1.msra.mxu0 %v670
        %691 = vmatprep.subr.mxu0 0.0
        %692 = vmatpush1.msra.mxu0 %v671
        %693 = vmatprep.subr.mxu0 0.0
        %694 = vmatpush1.msra.mxu0 %v672
        %695 = vmatprep.subr.mxu0 0.0
        %696 = vmatpush1.msra.mxu0 %v673
        %697 = vmatprep.subr.mxu0 0.0
        %698 = vmatpush1.msra.mxu0 %v674
        %699 = vmatprep.subr.mxu0 0.0
        %700 = vmatpush1.msra.mxu0 %v675
        %701 = vmatprep.subr.mxu0 0.0
        %702 = vmatpush1.msra.mxu0 %v676
        %703 = vmatprep.subr.mxu0 0.0
        %704 = vmatpush1.msra.mxu0 %v677
        %705 = vmatprep.subr.mxu0 0.0
        %706 = vmatpush1.msra.mxu0 %v678
        %707 = vmatprep.subr.mxu0 0.0
        %708 = vmatpush1.msra.mxu0 %v679
        %709 = vmatprep.subr.mxu0 0.0
        %710 = vmatpush1.msra.mxu0 %v680
        %711 = vmatprep.subr.mxu0 0.0
        %712 = vmatpush1.msra.mxu0 %v681
        %713 = vmatprep.subr.mxu0 0.0
        %714 = vmatpush1.msra.mxu0 %v682
        %715 = vmatprep.subr.mxu0 0.0
        %716 = vmatpush1.msra.mxu0 %v683
        %717 = vmatprep.subr.mxu0 0.0
        %718 = vmatpush1.msra.mxu0 %v684
        %719 = vmatprep.subr.mxu0 0.0
        %720 = vmatpush1.msra.mxu0 %v685
        %721 = vmatprep.subr.mxu0 0.0
        %722 = vmatpush1.msra.mxu0 0.0
        %723 = vmatprep.subr.mxu0 0.0
        %724 = vmatpush1.msra.mxu0 0.0
        %725 = vmatprep.subr.mxu0 0.0
        %726 = vmatpush1.msra.mxu0 0.0
        %727 = vmatprep.subr.mxu0 0.0
        %728 = vmatpush1.msra.mxu0 0.0
        %729 = vmatprep.subr.mxu0 0.0
        %730 = vmatpush1.msra.mxu0 0.0
        %731 = vmatprep.subr.mxu0 0.0
        %732 = vmatpush1.msra.mxu0 0.0
        %733 = vmatprep.subr.mxu0 0.0
        %734 = vmatpush1.msra.mxu0 0.0
        %735 = vmatprep.subr.mxu0 0.0
        %736 = vmatpush1.msra.mxu0 0.0
        %737 = vmatprep.subr.mxu0 0.0
        %738 = vmatpush1.msra.mxu0 0.0
        %739 = vmatprep.subr.mxu0 0.0
        %740 = vmatpush1.msra.mxu0 0.0
        %741 = vmatprep.subr.mxu0 0.0
        %742 = vmatpush1.msra.mxu0 0.0
        %743 = vmatprep.subr.mxu0 0.0
        %744 = vmatpush1.msra.mxu0 0.0
        %745 = vmatprep.subr.mxu0 0.0
        %746 = vmatpush1.msra.mxu0 0.0
        %747 = vmatprep.subr.mxu0 0.0
        %748 = vmatpush1.msra.mxu0 0.0
        %749 = vmatprep.subr.mxu0 0.0
        %750 = vmatpush1.msra.mxu0 0.0
        %751 = vmatprep.subr.mxu0 0.0
        %752 = vmatpush1.msra.mxu0 0.0
        %753 = vmatprep.mubr.f32.mxu0 0.0
        %754 = vmatmul.mubr.f32.gmra.mrb[0].mxu0 %v686
        %v755 = vpop.f32.mrb[0].mxu0
        %v756 = vadd.f32 %v688, %v755
        %v757 = vpop.f32.mrb[0].mxu0
        %758 = vdwg.mxu0
        %759 = vst [vmem:[%s5] sm:$0x1] %v756
      $region48: #{mlp_aligner_forward.1} parent=39 // pred_fallthru
        _
      // Predicated region
      $region49: #{mlp_aligner_forward.1} parent=39 // pred_check
        %p760 = pneg %p139
      $region50: #{mlp_aligner_forward.1} parent=39 // pred_check_branch
        %762 = sbr.rel (%p760) target = $region52
      $region51: #{mlp_aligner_forward.1} parent=39 // pred_region
        _
      $region52: #{mlp_aligner_forward.1} parent=39 // pred_fallthru
        _
      // Predicated region
      $region53: #{mlp_aligner_forward.1} parent=39 // pred_check
        %p763 = pneg %p139
      $region54: #{mlp_aligner_forward.1} parent=39 // pred_check_branch
        %765 = sbr.rel (%p763) target = $region56
      $region55: #{mlp_aligner_forward.1} parent=39 // pred_region
        _
      $region56: #{mlp_aligner_forward.1} parent=39 // pred_fallthru
        _
    $region40: #{mlp_aligner_forward.1} parent=5 // pred_fallthru
      _
    %p766 = scmp.le.s32.totalorder 2, %s11
    // Predicated region
    $region57: #{mlp_aligner_forward.1} parent=5 // pred_check
      %p767 = pneg %p766
    $region58: #{mlp_aligner_forward.1} parent=5 // pred_check_branch
      %769 = sbr.rel (%p767) target = $region60
    $region59: #{mlp_aligner_forward.1} parent=5 // pred_region
      %s770 = ssub.s32 %s11, 2
    $region60: #{mlp_aligner_forward.1} parent=5 // pred_fallthru
      _
  $region6: #{mlp_aligner_forward.1} parent=0 // loop_footer
    %s15 = sadd.s32 1, %s11
  $region7: #{mlp_aligner_forward.1} parent=0 // loop_footer_branch
    %10 = sbr.rel target = $region3
  $region8: #{mlp_aligner_forward.1} parent=0 // loop_exit
    _

</llo_original>
